<compile_context>
chip_gen: v5e
topology: v5e:2x2
jax: 0.10.0
libtpu: 0.0.40
codegen_flags: <defaults>
</compile_context>

<pallas_src>
import functools

import jax
import jax.numpy as jnp
from jax.experimental import pallas as pl
from jax.experimental.pallas import tpu as pltpu

_LANES = 128
_SUBLANES = 8


def _round_up(a, b):
    return pl.cdiv(a, b) * b


# ---------------------------------------------------------------------------
# p == 1 fast path: y = x * w + b on lane-dense (rows, 128) slabs.
# ---------------------------------------------------------------------------
def _p1_kernel(x_ref, w_ref, b_ref, o_ref):
    # x: (block_rows, 128) lane-dense view of a chunk of the (N, 1) input.
    # w, b: f32 scalars in SMEM.  Pure VPU FMA, full-width vector stores.
    o_ref[...] = (x_ref[...] * w_ref[0] + b_ref[0]).astype(o_ref.dtype)


def _forward_p1(x, weight, bias, block_rows=4096):
    N = x.shape[0]
    xf = x.reshape(-1)
    n_pad = _round_up(N, _LANES)            # lane pad only; no-op when N % 128 == 0
    if n_pad != N:
        xf = jnp.pad(xf, (0, n_pad - N))
    rows = n_pad // _LANES
    x2 = xf.reshape(rows, _LANES)           # lane-dense view (layout-preserving)

    if rows >= 2 * _SUBLANES:
        # Multiple of 8 sublanes, >=2 grid steps for megacore, <=2 MiB per tile.
        block_rows = min(block_rows, _round_up(pl.cdiv(rows, 2), _SUBLANES))
    else:
        block_rows = rows                   # full-extent block (layout rule: equals dim)
    grid = (pl.cdiv(rows, block_rows),)     # ragged final block is write-masked

    out = pl.pallas_call(
        _p1_kernel,
        out_shape=jax.ShapeDtypeStruct((rows, _LANES), jnp.float32),
        grid=grid,
        in_specs=[
            pl.BlockSpec((block_rows, _LANES), lambda i: (i, 0)),
            pl.BlockSpec(memory_space=pltpu.MemorySpace.SMEM),   # weight scalar
            pl.BlockSpec(memory_space=pltpu.MemorySpace.SMEM),   # bias scalar
        ],
        out_specs=pl.BlockSpec((block_rows, _LANES), lambda i: (i, 0)),
        compiler_params=pltpu.CompilerParams(dimension_semantics=("parallel",)),
        cost_estimate=pl.CostEstimate(
            flops=2 * N, transcendentals=0, bytes_accessed=8 * N + 8),
    )(x2, weight.reshape(1).astype(jnp.float32), bias.reshape(1).astype(jnp.float32))

    if n_pad != N:
        return out.reshape(-1)[:N].reshape(N, 1)
    return out.reshape(N, 1)                # free: no data movement


# ---------------------------------------------------------------------------
# General path (in_features P > 1): batch-tiled + reduction(P)-tiled VPU FMA/reduce.
# ---------------------------------------------------------------------------
def _general_kernel(x_ref, w_ref, b_ref, o_ref, acc_ref, *, p_total, block_p):
    k = pl.program_id(1)

    @pl.when(k == 0)
    def _():
        acc_ref[...] = jnp.zeros_like(acc_ref)

    x = x_ref[...].astype(jnp.float32)
    w = w_ref[...].astype(jnp.float32)
    prod = x * w                                        # VPU, no narrow MXU matvec
    if p_total % block_p != 0:
        # Mask out-of-range columns of the final (ragged) reduction block.
        col = jax.lax.broadcasted_iota(jnp.int32, prod.shape, 1) + k * block_p
        prod = jnp.where(col < p_total, prod, 0.0)
    acc_ref[...] += jnp.sum(prod, axis=-1, keepdims=True)   # XLU lane reduce

    @pl.when(k == pl.num_programs(1) - 1)
    def _():
        o_ref[...] = (acc_ref[...] + b_ref[0]).astype(o_ref.dtype)


def _forward_general(x, weight, bias, block_n_max=2048, block_p_max=512,
                     x_tile_bytes=3 * 1024 * 1024):
    N, P = x.shape

    # Reduction (P) tiling: full P if small, else 512-wide lane-aligned tiles.
    block_p = P if P <= block_p_max else block_p_max
    p_blocks = pl.cdiv(P, block_p)

    # Batch tiling: budget the double-buffered x tile with the *lane-padded*
    # width, keep >=2 batch steps for v7x megacore, sublane-aligned blocks.
    lane_p = _round_up(block_p, _LANES)
    max_rows = max(_SUBLANES, (x_tile_bytes // (4 * lane_p)) // _SUBLANES * _SUBLANES)
    if N >= 2 * _SUBLANES:
        block_n = min(block_n_max, max_rows, _round_up(pl.cdiv(N, 2), _SUBLANES))
    else:
        block_n = N
    n_blocks = pl.cdiv(N, block_n)          # ragged final batch block is masked

    kernel = functools.partial(_general_kernel, p_total=P, block_p=block_p)

    # TODO(synk): emit a lane-dense (block_n//128, 128) output slab instead of the
    # (block_n, 1) column to avoid 1-lane-wide stores when P is very small.
    out = pl.pallas_call(
        kernel,
        out_shape=jax.ShapeDtypeStruct((N, 1), jnp.float32),
        grid=(n_blocks, p_blocks),
        in_specs=[
            pl.BlockSpec((block_n, block_p), lambda i, k: (i, k)),
            pl.BlockSpec((1, block_p), lambda i, k: (0, k)),      # weight row tile
            pl.BlockSpec(memory_space=pltpu.MemorySpace.SMEM),    # bias scalar
        ],
        out_specs=pl.BlockSpec((block_n, 1), lambda i, k: (i, 0)),
        scratch_shapes=[pltpu.VMEM((block_n, 1), jnp.float32)],
        compiler_params=pltpu.CompilerParams(
            dimension_semantics=("parallel", "arbitrary")),
        cost_estimate=pl.CostEstimate(
            flops=2 * N * P, transcendentals=0,
            bytes_accessed=4 * (N * P + N + P + 1)),
    )(x, weight.astype(jnp.float32), bias.reshape(1).astype(jnp.float32))
    return out


def regression_model_forward(x, weight, bias):
    """Forward pass of RegressionModel: y = x @ weight.T + bias (nn.Linear(p, 1))."""
    _, P = x.shape
    if P == 1:
        return _forward_p1(x, weight, bias)
    return _forward_general(x, weight, bias)


if __name__ == "__main__":
    p_feat = 1            # matches module-level `p = 1`
    key = jax.random.PRNGKey(0)
    kx, kw, kb, kx2, kx3, kw3, kb3, kx4, kw4, kb4 = jax.random.split(key, 10)

    # Parameter init mimicking nn.Linear's uniform(-1/sqrt(p), 1/sqrt(p)).
    bound = 1.0 / float(jnp.sqrt(jnp.float32(p_feat)))
    weight = jax.random.uniform(kw, (1, p_feat), jnp.float32, -bound, bound)
    bias = jax.random.uniform(kb, (1,), jnp.float32, -bound, bound)

    # 1) Lane-aligned batch: no pad, no slice, 2 grid steps.
    N = 2048
    x = jax.random.normal(kx, (N, p_feat), jnp.float32)
    out = jax.block_until_ready(regression_model_forward(x, weight, bias))
    ref = x @ weight.T + bias
    assert out.shape == (N, 1)
    assert jnp.allclose(out, ref, atol=1e-5), "p=1 lane-aligned path mismatch"

    # 2) Ragged batch: exercises the minimal 128-lane pad, the masked partial
    #    final block, and the tail slice.
    N2 = 2500
    x2 = jax.random.normal(kx2, (N2, p_feat), jnp.float32)
    out2 = jax.block_until_ready(regression_model_forward(x2, weight, bias))
    assert out2.shape == (N2, 1)
    assert jnp.allclose(out2, x2 @ weight.T + bias, atol=1e-5), "p=1 ragged path mismatch"

    # 3) General path, single reduction block (P <= 512).
    P3, N3 = 4, 64
    w3 = jax.random.uniform(kw3, (1, P3), jnp.float32, -0.5, 0.5)
    b3 = jax.random.uniform(kb3, (1,), jnp.float32, -0.5, 0.5)
    x3 = jax.random.normal(kx3, (N3, P3), jnp.float32)
    out3 = jax.block_until_ready(regression_model_forward(x3, w3, b3))
    assert out3.shape == (N3, 1)
    assert jnp.allclose(out3, x3 @ w3.T + b3, atol=1e-5), "general path mismatch"

    # 4) General path with P tiling + masked ragged reduction block + ragged batch.
    P4, N4 = 600, 100
    w4 = jax.random.uniform(kw4, (1, P4), jnp.float32, -0.5, 0.5)
    b4 = jax.random.uniform(kb4, (1,), jnp.float32, -0.5, 0.5)
    x4 = jax.random.normal(kx4, (N4, P4), jnp.float32)
    out4 = jax.block_until_ready(regression_model_forward(x4, w4, b4))
    assert out4.shape == (N4, 1)
    assert jnp.allclose(out4, x4 @ w4.T + b4, atol=1e-3), "P-tiled general path mismatch"

    print("KERNEL_OK")
</pallas_src>

<mosaic_0001>
module attributes {stable_mosaic.version = 11 : i64} {
  func.func @_p1_kernel(%arg0: i32, %arg1: memref<8x128xf32, #tpu.memory_space<vmem>>, %arg2: memref<1xf32, #tpu.memory_space<smem>>, %arg3: memref<1xf32, #tpu.memory_space<smem>>, %arg4: memref<8x128xf32, #tpu.memory_space<vmem>>) attributes {dimension_semantics = [#tpu.dimension_semantics<parallel>], iteration_bounds = array<i64: 2>, scalar_prefetch = 0 : i64, scratch_operands = 0 : i64, tpu.core_type = #tpu.core_type<tc>, window_params = [{transform_indices = @transform_0, window_bounds = array<i64: 8, 128>}, {transform_indices = @transform_1, window_bounds = array<i64: 1>}, {transform_indices = @transform_2, window_bounds = array<i64: 1>}, {transform_indices = @transform_3, window_bounds = array<i64: 8, 128>}]} {
    %c0 = arith.constant 0 : index
    %c0_0 = arith.constant 0 : index
    %0 = vector.load %arg1[%c0, %c0_0] : memref<8x128xf32, #tpu.memory_space<vmem>>, vector<8x128xf32>
    %c0_1 = arith.constant 0 : index
    %1 = memref.load %arg2[%c0_1] : memref<1xf32, #tpu.memory_space<smem>>
    %2 = vector.broadcast %1 : f32 to vector<8x128xf32>
    %3 = arith.mulf %0, %2 : vector<8x128xf32>
    %c0_2 = arith.constant 0 : index
    %4 = memref.load %arg3[%c0_2] : memref<1xf32, #tpu.memory_space<smem>>
    %5 = vector.broadcast %4 : f32 to vector<8x128xf32>
    %6 = arith.addf %3, %5 : vector<8x128xf32>
    %c0_3 = arith.constant 0 : index
    %c0_4 = arith.constant 0 : index
    %7 = vector.load %arg4[%c0_3, %c0_4] : memref<8x128xf32, #tpu.memory_space<vmem>>, vector<8x128xf32>
    tpu.vector_store %arg4[%c0_3, %c0_4], %6 {strides = array<i32>} : memref<8x128xf32, #tpu.memory_space<vmem>>, vector<8x128xf32>,
    return
  }
  func.func @transform_0(%arg0: i32) -> (i32, i32) {
    %c0_i32 = arith.constant 0 : i32
    %c0_i32_0 = arith.constant 0 : i32
    return %arg0, %c0_i32 : i32, i32
  }
  func.func @transform_1(%arg0: i32) -> i32 {
    %c0_i32 = arith.constant 0 : i32
    %c0_i32_0 = arith.constant 0 : i32
    return %c0_i32 : i32
  }
  func.func @transform_2(%arg0: i32) -> i32 {
    %c0_i32 = arith.constant 0 : i32
    %c0_i32_0 = arith.constant 0 : i32
    return %c0_i32 : i32
  }
  func.func @transform_3(%arg0: i32) -> (i32, i32) {
    %c0_i32 = arith.constant 0 : i32
    %c0_i32_0 = arith.constant 0 : i32
    return %arg0, %c0_i32 : i32, i32
  }
}

</mosaic_0001>

<llo_original>
// kernel: tpu_custom_call.1
$region0: #{tpu_custom_call.1}
  #allocation0 [shape = 'u32[]', space=smem, size = 0x4, offset = 0x4, fixed_abs, tag = 'smem constant byte address 0x4 - core index']
  #allocation1 [shape = 'u32[72,128]{1,0:T(1,128)}', space=vmem, size = 0x9000, scoped, tag = 'internal scratch']
  #allocation2 [shape = 'f32[1]{0:T(128)S(6)}', space=smem, size = 0x200, scoped, tag = 'scoped memory for tpu_custom_call.1']
  #allocation3 [shape = 'f32[1]{0:T(128)S(6)}', space=smem, size = 0x200, scoped, tag = 'scoped memory for tpu_custom_call.1']
  %s0 = inlined_call_operand.hbm [shape: f32[16,128], index: 0, kind: input, shape index: {}]
  %s1 = inlined_call_operand.<no memory space> [shape: f32[1], index: 1, kind: input, shape index: {}]
  %s2 = inlined_call_operand.<no memory space> [shape: f32[1], index: 2, kind: input, shape index: {}]
  %s3 = inlined_call_operand.hbm [shape: f32[16,128], index: 3, kind: output, shape index: {}]
  %s4 = sld [smem:[#allocation0]]
  $region49: #{tpu_custom_call.1} parent=0
    _
  %s6 = ssub.s32 1, %s4
  %s7 = scalar_select 0, %s6, %s4
  %8 = sst [smem:[#allocation2]] %s1
  %9 = sst [smem:[#allocation3]] %s2
  $region1: #{tpu_custom_call.1} parent=0
    #allocation4 [shape = 'u8[8192]{0}', space=vmem, size = 0x2000, scoped, tag = 'input window, operand 0']
    #allocation5 [shape = 's32[2]{0}', space=sflag, size = 0x8, scoped, tag = 'scoped memory for tpu_custom_call.1']
    #allocation6 [shape = 's32[2]{0}', space=sflag, size = 0x8, scoped, tag = 'scoped memory for tpu_custom_call.1']
    #allocation7 [shape = 'u8[8192]{0}', space=vmem, size = 0x2000, scoped, tag = 'output window, operand 0']
    %10 = vsyncpa [#allocation5], 0
    %s11 = scalar_lea.sflag [#allocation5], 1
    %12 = vsyncpa %s11, 0
    %13 = vsyncpa [#allocation6], 0
    %s14 = scalar_lea.sflag [#allocation6], 1
    %15 = vsyncpa %s14, 0
    loop: start=0, step=1, limit=4
    $region2: #{tpu_custom_call.1} parent=1 // loop_pre_header
      _
    $region3: #{tpu_custom_call.1} parent=1 // loop_header
      %s17 = sphi 0, %s21
      %p18 = scmp.ge.s32.totalorder %s17, 4
      %s27 = sphi 0, %s29
      %s30 = sphi 0, %s27
      %s31 = sphi 0, %s30
      %s47 = sphi 0, %s31
      %s51 = sphi 0, %s51
      %s53 = sphi 0, %s51
      %s54 = sphi 0, %s53
      %s68 = sphi 0, %s54
      %s72 = sphi 0, %s72
      %s74 = sphi 0, %s72
      %s75 = sphi 0, %s74
      %s89 = sphi 0, %s75
      %s95 = sphi 0, %s97
      %s98 = sphi 0, %s95
      %s99 = sphi 0, %s98
      %s115 = sphi 0, %s99
    $region4: #{tpu_custom_call.1} parent=1 // loop_header_branch
      %20 = sbr.rel (%p18) target = $region8
    $region5: #{tpu_custom_call.1} parent=1 // loop_body
      %s22 = ssub.s32 %s17, 1
      %s23 = ssub.s32 %s17, 2
      %s24 = sadd.s32 %s17, 1
      %s25 = ssub.s32 %s17, %s24
      %p26 = scmp.eq.s32.totalorder %s25, 0
      %s28 = sadd.s32 %s27, 1
      %s29 = scalar_select %p26, %s27, %s28
      %p32 = pneg %p26
      %p33 = scmp.eq.s32.totalorder %s17, 1
      %p34 = por %p32, %p33
      %p35 = scmp.ne.s32.totalorder %s27, %s30
      %p36 = scmp.eq.s32.totalorder %s17, 0
      %p37 = por %p35, %p36
      %p38 = scmp.ne.s32.totalorder %s27, %s30
      %p39 = scmp.eq.s32.totalorder %s22, 1
      %p40 = por %p38, %p39
      %p41 = scmp.ne.s32.totalorder %s30, %s31
      %p42 = scmp.eq.s32.totalorder %s22, 0
      %p43 = por %p41, %p42
      %p44 = scmp.ne.s32.totalorder %s30, %s31
      %p45 = scmp.eq.s32.totalorder %s23, 1
      %p46 = por %p44, %p45
      %p48 = scmp.ne.s32.totalorder %s31, %s47
      %p49 = scmp.eq.s32.totalorder %s23, 0
      %p50 = por %p48, %p49
      %s52 = sadd.s32 %s51, 1
      %p55 = scmp.eq.s32.totalorder %s17, 1
      %p56 = scmp.ne.s32.totalorder %s51, %s53
      %p57 = scmp.eq.s32.totalorder %s17, 0
      %p58 = por %p56, %p57
      %p59 = scmp.ne.s32.totalorder %s51, %s53
      %p60 = scmp.eq.s32.totalorder %s22, 1
      %p61 = por %p59, %p60
      %p62 = scmp.ne.s32.totalorder %s53, %s54
      %p63 = scmp.eq.s32.totalorder %s22, 0
      %p64 = por %p62, %p63
      %p65 = scmp.ne.s32.totalorder %s53, %s54
      %p66 = scmp.eq.s32.totalorder %s23, 1
      %p67 = por %p65, %p66
      %p69 = scmp.ne.s32.totalorder %s54, %s68
      %p70 = scmp.eq.s32.totalorder %s23, 0
      %p71 = por %p69, %p70
      %s73 = sadd.s32 %s72, 1
      %p76 = scmp.eq.s32.totalorder %s17, 1
      %p77 = scmp.ne.s32.totalorder %s72, %s74
      %p78 = scmp.eq.s32.totalorder %s17, 0
      %p79 = por %p77, %p78
      %p80 = scmp.ne.s32.totalorder %s72, %s74
      %p81 = scmp.eq.s32.totalorder %s22, 1
      %p82 = por %p80, %p81
      %p83 = scmp.ne.s32.totalorder %s74, %s75
      %p84 = scmp.eq.s32.totalorder %s22, 0
      %p85 = por %p83, %p84
      %p86 = scmp.ne.s32.totalorder %s74, %s75
      %p87 = scmp.eq.s32.totalorder %s23, 1
      %p88 = por %p86, %p87
      %p90 = scmp.ne.s32.totalorder %s75, %s89
      %p91 = scmp.eq.s32.totalorder %s23, 0
      %p92 = por %p90, %p91
      %s93 = ssub.s32 %s17, %s24
      %p94 = scmp.eq.s32.totalorder %s93, 0
      %s96 = sadd.s32 %s95, 1
      %s97 = scalar_select %p94, %s95, %s96
      %p100 = pneg %p94
      %p101 = scmp.eq.s32.totalorder %s17, 1
      %p102 = por %p100, %p101
      %p103 = scmp.ne.s32.totalorder %s95, %s98
      %p104 = scmp.eq.s32.totalorder %s17, 0
      %p105 = por %p103, %p104
      %p106 = scmp.ne.s32.totalorder %s95, %s98
      %p107 = scmp.eq.s32.totalorder %s22, 1
      %p108 = por %p106, %p107
      %p109 = scmp.ne.s32.totalorder %s98, %s99
      %p110 = scmp.eq.s32.totalorder %s22, 0
      %p111 = por %p109, %p110
      %p112 = scmp.ne.s32.totalorder %s98, %s99
      %p113 = scmp.eq.s32.totalorder %s23, 1
      %p114 = por %p112, %p113
      %p116 = scmp.ne.s32.totalorder %s99, %s115
      %p117 = scmp.eq.s32.totalorder %s23, 0
      %p118 = por %p116, %p117
      %p119 = scmp.le.s32.totalorder 1, %s17
      %p120 = scmp.lt.s32.totalorder %s17, 3
      %p121 = pnand %p119, %p120
      %p122 = pneg %p121
      // Predicated region
      $region9: #{tpu_custom_call.1} parent=5 // pred_check
        _
      $region10: #{tpu_custom_call.1} parent=5 // pred_check_branch
        %124 = sbr.rel (%p121) target = $region12
      $region11: #{tpu_custom_call.1} parent=5 // pred_region
        %s125 = ssub.s32 %s17, 1
        // Predicated region
        $region13: #{tpu_custom_call.1} parent=11 // pred_check
          %p126 = pneg %p64
        $region14: #{tpu_custom_call.1} parent=11 // pred_check_branch
          %128 = sbr.rel (%p126) target = $region16
        $region15: #{tpu_custom_call.1} parent=11 // pred_region
          _
        $region16: #{tpu_custom_call.1} parent=11 // pred_fallthru
          _
        // Predicated region
        $region17: #{tpu_custom_call.1} parent=11 // pred_check
          %p129 = pneg %p85
        $region18: #{tpu_custom_call.1} parent=11 // pred_check_branch
          %131 = sbr.rel (%p129) target = $region20
        $region19: #{tpu_custom_call.1} parent=11 // pred_region
          _
        $region20: #{tpu_custom_call.1} parent=11 // pred_fallthru
          _
      $region12: #{tpu_custom_call.1} parent=5 // pred_fallthru
        _
      %p132 = scmp.lt.s32.totalorder %s17, 2
      // Predicated region
      $region21: #{tpu_custom_call.1} parent=5 // pred_check
        %p133 = pneg %p132
      $region22: #{tpu_custom_call.1} parent=5 // pred_check_branch
        %135 = sbr.rel (%p133) target = $region24
      $region23: #{tpu_custom_call.1} parent=5 // pred_region
        // Predicated region
        $region25: #{tpu_custom_call.1} parent=23 // pred_check
          %p136 = pneg %p37
        $region26: #{tpu_custom_call.1} parent=23 // pred_check_branch
          %138 = sbr.rel (%p136) target = $region28
        $region27: #{tpu_custom_call.1} parent=23 // pred_region
          %s139 = sand.u32 %s27, 1
          %s140 = scalar_lea.sflag [#allocation5], %s139
          %s141 = sand.u32 %s27, 1
          %s142 = smul.addr %s141, 8
          %s143 = scalar_lea.vmem [#allocation4], %s142
          %145 = vsyncadd %s140, 0
          %s146 = smul.addr %s17, 8
          %s147 = scalar_lea.hbm %s0, %s146
          %s149 = sshll.u32 %s147, 4
          %s150 = int_to_ptr.hbm [resolvable:$true] %s149
          %s151 = sshll.u32 %s143, 4
          %s152 = int_to_ptr.vmem [resolvable:$true] %s151
          %154 = dma.hbm_to_vmem [thread:$0]  %s150, 128, %s152, %s140
        $region28: #{tpu_custom_call.1} parent=23 // pred_fallthru
          _
      $region24: #{tpu_custom_call.1} parent=5 // pred_fallthru
        _
      %p155 = scmp.le.s32.totalorder 1, %s17
      %p156 = scmp.lt.s32.totalorder %s17, 3
      %p157 = pnand %p155, %p156
      %p158 = pneg %p157
      // Predicated region
      $region29: #{tpu_custom_call.1} parent=5 // pred_check
        _
      $region30: #{tpu_custom_call.1} parent=5 // pred_check_branch
        %160 = sbr.rel (%p157) target = $region32
      $region31: #{tpu_custom_call.1} parent=5 // pred_region
        %s161 = ssub.s32 %s17, 1
        %s162 = sand.u32 %s30, 1
        %s163 = scalar_lea.sflag [#allocation5], %s162
        %s164 = sand.u32 %s30, 1
        %s165 = smul.addr %s164, 8
        %s166 = scalar_lea.vmem [#allocation4], %s165
        // Predicated region
        $region33: #{tpu_custom_call.1} parent=31 // pred_check
          %p167 = pneg %p43
        $region34: #{tpu_custom_call.1} parent=31 // pred_check_branch
          %169 = sbr.rel (%p167) target = $region36
        $region35: #{tpu_custom_call.1} parent=31 // pred_region
          %171 = dma.done %s163, 128
        $region36: #{tpu_custom_call.1} parent=31 // pred_fallthru
          _
        %s172 = sand.u32 %s30, 1
        %s173 = scalar_lea.sflag [#allocation5], %s172
        %s174 = sand.u32 %s30, 1
        %s175 = smul.addr %s174, 8
        %s176 = scalar_lea.vmem [#allocation4], %s175
        %p177 = pneg %p43
        %p178 = pneg %p40
        %p179 = pneg %p64
        %p180 = pneg %p61
        %p181 = pneg %p85
        %p182 = pneg %p82
        %p183 = pneg %p111
        %p184 = pneg %p108
        %s185 = sand.u32 %s98, 1
        %s186 = scalar_lea.sflag [#allocation6], %s185
        %s187 = sand.u32 %s98, 1
        %s188 = smul.addr %s187, 8
        %s189 = scalar_lea.vmem [#allocation7], %s188
        %v190 = vld [vmem:[%s166] sm:$0xff]
        %s191 = sld [smem:[#allocation2]]
        %v192 = vstv %s191
        %v193 = vmul.f32 %v190, %v192
        %s194 = sld [smem:[#allocation3]]
        %v195 = vstv %s194
        %v196 = vadd.f32 %v193, %v195
        %197 = vst [vmem:[%s189] sm:$0xff] %v196
        %s198 = sand.u32 %s98, 1
        %s199 = scalar_lea.sflag [#allocation6], %s198
        %s200 = sand.u32 %s98, 1
        %s201 = smul.addr %s200, 8
        %s202 = scalar_lea.vmem [#allocation7], %s201
        // Predicated region
        $region37: #{tpu_custom_call.1} parent=31 // pred_check
          %p203 = pneg %p108
        $region38: #{tpu_custom_call.1} parent=31 // pred_check_branch
          %205 = sbr.rel (%p203) target = $region40
        $region39: #{tpu_custom_call.1} parent=31 // pred_region
          %207 = vsyncadd %s199, 0
          %s208 = smul.addr %s22, 8
          %s209 = scalar_lea.hbm %s3, %s208
          %s211 = sshll.u32 %s202, 4
          %s212 = int_to_ptr.vmem [resolvable:$true] %s211
          %s213 = sshll.u32 %s209, 4
          %s214 = int_to_ptr.hbm [resolvable:$true] %s213
          %216 = dma.vmem_to_hbm [thread:$0]  %s212, 128, %s214, %s199
        $region40: #{tpu_custom_call.1} parent=31 // pred_fallthru
          _
      $region32: #{tpu_custom_call.1} parent=5 // pred_fallthru
        _
      %p217 = scmp.le.s32.totalorder 2, %s17
      // Predicated region
      $region41: #{tpu_custom_call.1} parent=5 // pred_check
        %p218 = pneg %p217
      $region42: #{tpu_custom_call.1} parent=5 // pred_check_branch
        %220 = sbr.rel (%p218) target = $region44
      $region43: #{tpu_custom_call.1} parent=5 // pred_region
        %s221 = ssub.s32 %s17, 2
        // Predicated region
        $region45: #{tpu_custom_call.1} parent=43 // pred_check
          %p222 = pneg %p114
        $region46: #{tpu_custom_call.1} parent=43 // pred_check_branch
          %224 = sbr.rel (%p222) target = $region48
        $region47: #{tpu_custom_call.1} parent=43 // pred_region
          %s225 = sand.u32 %s99, 1
          %s226 = scalar_lea.sflag [#allocation6], %s225
          %s227 = sand.u32 %s99, 1
          %s228 = smul.addr %s227, 8
          %s229 = scalar_lea.vmem [#allocation7], %s228
          %231 = dma.done %s226, 128
        $region48: #{tpu_custom_call.1} parent=43 // pred_fallthru
          _
      $region44: #{tpu_custom_call.1} parent=5 // pred_fallthru
        _
    $region6: #{tpu_custom_call.1} parent=1 // loop_footer
      %s21 = sadd.s32 1, %s17
    $region7: #{tpu_custom_call.1} parent=1 // loop_footer_branch
      %16 = sbr.rel target = $region3
    $region8: #{tpu_custom_call.1} parent=1 // loop_exit
      _
    %232 = vsyncpa [#allocation5], 1
    %s233 = scalar_lea.sflag [#allocation5], 1
    %234 = vsyncpa %s233, 1
    %235 = vsyncpa [#allocation6], 1
    %s236 = scalar_lea.sflag [#allocation6], 1
    %237 = vsyncpa %s236, 1

</llo_original>
